<compile_context>
chip_gen: v7x
topology: tpu7x:2x2x1
jax: 0.10.0
libtpu: 0.0.40
codegen_flags: <defaults>
</compile_context>

<pallas_src>
import jax
import jax.numpy as jnp
from jax.experimental import pallas as pl
from jax.experimental.pallas import tpu as pltpu


# ---------------------------------------------------------------------------
# Pallas kernels: direct HBM->HBM DMA copies (no VMEM staging, no grid).
# ---------------------------------------------------------------------------

def _dma_copy1_kernel(x_hbm, o_hbm, sem):
    cp = pltpu.make_async_copy(x_hbm, o_hbm, sem)
    cp.start()
    cp.wait()


def _dma_copy2_kernel(lo_hbm, hi_hbm, olo_hbm, ohi_hbm, sem):
    cp0 = pltpu.make_async_copy(lo_hbm, olo_hbm, sem.at[0])
    cp1 = pltpu.make_async_copy(hi_hbm, ohi_hbm, sem.at[1])
    cp0.start()
    cp1.start()           # both DMAs in flight before either wait
    cp0.wait()
    cp1.wait()


def _pallas_hbm_copy(*arrays):
    """Bit-exact HBM->HBM copy of one or two same-shape arrays via a single
    pallas_call (one DMA engine transfer per array).  Pure DMA work at the HBM
    roofline; could be split into a few large slices for multi-engine overlap
    on very large tensors, but a single descriptor is optimal for typical
    bound-tensor sizes."""
    n = len(arrays)
    any_spec = pl.BlockSpec(memory_space=pl.ANY)
    if n == 1:
        kernel = _dma_copy1_kernel
        out_shape = jax.ShapeDtypeStruct(arrays[0].shape, arrays[0].dtype)
        out_specs = any_spec
        sems = pltpu.SemaphoreType.DMA(())
    else:
        kernel = _dma_copy2_kernel
        out_shape = tuple(jax.ShapeDtypeStruct(a.shape, a.dtype) for a in arrays)
        out_specs = tuple([any_spec] * n)
        sems = pltpu.SemaphoreType.DMA((n,))
    return pl.pallas_call(
        kernel,
        out_shape=out_shape,
        in_specs=[any_spec] * n,
        out_specs=out_specs,
        scratch_shapes=[sems],
    )(*arrays)


# ---------------------------------------------------------------------------
# BoundSqueeze forward / IBP
# ---------------------------------------------------------------------------

def _normalize_axis(axis, ndim):
    return axis + ndim if axis < 0 else axis


def bound_squeeze_forward(x, axes: int, materialize: bool = False):
    """BoundSqueeze.forward.  materialize=False -> free metadata squeeze;
    materialize=True -> Pallas HBM->HBM DMA copy (fusion-site stand-in)."""
    ax = _normalize_axis(axes, x.ndim)
    if x.shape[ax] != 1:
        return x  # torch.squeeze(dim) is a no-op on non-size-1 dims
    out_shape = tuple(s for i, s in enumerate(x.shape) if i != ax)
    if not materialize:
        return jnp.squeeze(x, axis=ax)
    # Reshape is a free metadata change; DMA src/dst then have identical shapes.
    return _pallas_hbm_copy(x.reshape(out_shape))


def bound_squeeze_interval(h_L, h_U, axes: int, materialize: bool = False):
    """Interval propagation: squeeze both bounds.  Materialized path is one
    fused 2-in / 2-out pallas_call (two concurrent DMAs)."""
    assert h_L.shape == h_U.shape and h_L.dtype == h_U.dtype
    ax = _normalize_axis(axes, h_L.ndim)
    if h_L.shape[ax] != 1:
        return h_L, h_U
    out_shape = tuple(s for i, s in enumerate(h_L.shape) if i != ax)
    if not materialize:
        return jnp.squeeze(h_L, axis=ax), jnp.squeeze(h_U, axis=ax)
    return _pallas_hbm_copy(h_L.reshape(out_shape), h_U.reshape(out_shape))


class BoundSqueezePallas:
    """Minimal JAX/Pallas mirror of auto_LiRPA's BoundSqueeze (forward + IBP)."""
    # TODO(synk): bound_backward raises NotImplementedError in the reference
    # module, so it has no Pallas translation here.

    def __init__(self, attr, materialize: bool = False):
        axes = attr["axes"]
        assert len(axes) == 1
        self.axes = axes[0]
        self.materialize = materialize

    def forward(self, x):
        return bound_squeeze_forward(x, self.axes, self.materialize)

    def interval_propagate(self, *v):
        assert len(v) == 1
        h_L, h_U = v[0]
        return bound_squeeze_interval(h_L, h_U, self.axes, self.materialize)


if __name__ == "__main__":
    key = jax.random.PRNGKey(0)
    k1, k2 = jax.random.split(key)

    # Small shape consistent with the module: batch=2, size-1 axis to squeeze,
    # spatial 16 x 128.
    x = jax.random.normal(k1, (2, 1, 16, 128), dtype=jnp.float32)
    ref = jnp.squeeze(x, axis=1)

    # Materialized path: runs the Pallas HBM->HBM DMA kernel.
    mod = BoundSqueezePallas({"axes": [1]}, materialize=True)
    out = jax.block_until_ready(mod.forward(x))
    assert out.shape == ref.shape == (2, 16, 128)
    assert out.dtype == x.dtype
    assert bool(jnp.array_equal(out, ref))

    # axes == 0 and a non-128-divisible shape: the DMA path has no
    # divisibility / VMEM constraints (the old fragile fallback is gone).
    y = jax.random.normal(k2, (1, 7, 33), dtype=jnp.float32)
    m0 = BoundSqueezePallas({"axes": [0]}, materialize=True)
    out0 = jax.block_until_ready(m0.forward(y))
    assert bool(jnp.array_equal(out0, jnp.squeeze(y, axis=0)))

    # Fused interval propagation: one pallas_call, two concurrent DMAs.
    h_L, h_U = x - 0.1, x + 0.1
    lo, hi = jax.block_until_ready(mod.interval_propagate((h_L, h_U)))
    assert bool(jnp.array_equal(lo, jnp.squeeze(h_L, axis=1)))
    assert bool(jnp.array_equal(hi, jnp.squeeze(h_U, axis=1)))

    # Default (recommended) zero-work metadata path.
    fast = BoundSqueezePallas({"axes": [1]})
    assert bool(jnp.array_equal(jax.block_until_ready(fast.forward(x)), ref))
    flo, fhi = jax.block_until_ready(fast.interval_propagate((h_L, h_U)))
    assert bool(jnp.array_equal(flo, jnp.squeeze(h_L, axis=1)))
    assert bool(jnp.array_equal(fhi, jnp.squeeze(h_U, axis=1)))

    print("KERNEL_OK")
</pallas_src>

<mosaic_0001>
module attributes {stable_mosaic.version = 11 : i64} {
  func.func @_dma_copy1_kernel(%arg0: memref<2x16x128xf32, #tpu.memory_space<any>>, %arg1: memref<2x16x128xf32, #tpu.memory_space<any>>, %arg2: memref<!tpu.dma_semaphore, #tpu.memory_space<semaphore_mem>>) attributes {dimension_semantics = [], scalar_prefetch = 0 : i64, scratch_operands = 1 : i64, tpu.core_type = #tpu.core_type<tc>} {
    tpu.enqueue_dma source(%arg0 : memref<2x16x128xf32, #tpu.memory_space<any>>) target(%arg1 : memref<2x16x128xf32, #tpu.memory_space<any>>) target_semaphore(%arg2 : memref<!tpu.dma_semaphore, #tpu.memory_space<semaphore_mem>>)
    tpu.wait_dma2 semaphore(%arg2 : memref<!tpu.dma_semaphore, #tpu.memory_space<semaphore_mem>>) src(%arg0 : memref<2x16x128xf32, #tpu.memory_space<any>>) dst(%arg1 : memref<2x16x128xf32, #tpu.memory_space<any>>)
    return
  }
}

</mosaic_0001>

<llo_original>
// kernel: tpu_custom_call.1
$region0: #{tpu_custom_call.1}
  #allocation0 [shape = 'u32[]', space=smem, size = 0x4, offset = 0x4, fixed_abs, tag = 'smem constant byte address 0x4 - core index']
  #allocation1 [shape = 'u32[144,128]{1,0:T(1,128)}', space=vmem, size = 0x12000, scoped, tag = 'internal scratch']
  #allocation2 [shape = 's32[1]{0}', space=sflag, size = 0x4, scoped, tag = 'scratch operand']
  #allocation3 [shape = 's32[]', space=sflag, size = 0x4, offset = 0, fixed_abs, tag = 'sflag constant byte address 0x0 - dummy sync flag']
  #allocation4 [shape = 'u32[0]{0}', space=smem, size = 0, offset = 0, fixed_abs, tag = 'smem constant byte address 0x0 - null']
  %s0 = inlined_call_operand.hbm [shape: f32[2,16,128], index: 0, kind: input, shape index: {}]
  %s1 = inlined_call_operand.hbm [shape: f32[2,16,128], index: 1, kind: output, shape index: {}]
  %s2 = sld [smem:[#allocation0]]
  $region2: #{tpu_custom_call.1} parent=0
    _
  %s4 = ssub.s32 1, %s2
  %s5 = scalar_select 0, %s4, %s2
  %s7 = sshll.u32 1, 14
  %s8 = sxor.u32 4294967295, %s7
  %s11 = sshll.u32 3, 24
  %s12 = sxor.u32 4294967295, %s11
  %s13 = sand.u32 0, %s12
  %s15 = sor.u32 %s13, 0
  %18 = dma.general %s0, 512, %s1, [#allocation2], [#allocation3], [#allocation4], %s15, 0
  %s19 = smul.u32 2, 16
  %s20 = smul.u32 %s19, 1
  %s21 = sshll.u32 %s20, 4
  %22 = dma.done [#allocation2], %s21
  %23 = vsyncmov [#allocation2]
  %s24 = vpop.sfrf %23
  %p25 = scmp.eq.s32.totalorder %s24, 0
  %p26 = pneg %p25
  %28 = shalt.err (%p26)

</llo_original>
